<compile_context>
chip_gen: v6e
topology: v6e:2x2x1
jax: 0.10.0
libtpu: 0.0.40
codegen_flags: <defaults>
</compile_context>

<pallas_src>
import functools

import jax
import jax.numpy as jnp
from jax.experimental import pallas as pl
from jax.experimental.pallas import tpu as pltpu


def _if_spike(v):
    # spikingjelly IFNode, single step, v_threshold=1.0, hard reset, v0=0:
    # spike = heaviside(v - 1.0)
    return (v >= 1.0).astype(jnp.float32)


def _channel_attention_kernel(x_ref,
                              w1m_ref, b1m_ref, w2m_ref, b2m_ref,
                              w1a_ref, b1a_ref, w2a_ref, b2a_ref,
                              o_ref, *, hw_valid, inv_hw):
    x = x_ref[...]                                        # (B, C, HWp) f32
    hwp = x.shape[-1]

    if hw_valid != hwp:
        # General-H,W path: mask the spatial lane padding out of the reductions.
        lane = jax.lax.broadcasted_iota(jnp.int32, x.shape, 2)
        valid = lane < hw_valid
        neg_big = jnp.float32(jnp.finfo(jnp.float32).min)
        x_for_max = jnp.where(valid, x, neg_big)
        x_for_sum = jnp.where(valid, x, 0.0)
    else:
        x_for_max = x
        x_for_sum = x

    # Spatial pooling over lanes -> batched (B, C) pooled features (XLU reductions).
    max_p = jnp.max(x_for_max, axis=-1)                   # (B, C)
    avg_p = jnp.sum(x_for_sum, axis=-1) * inv_hw          # (B, C)

    def branch(p, w1t_ref, b1_ref, w2t_ref, b2_ref):
        # One batched matmul per linear layer; weights pre-transposed to
        # (in_features, out_features) in the wrapper.
        h = jnp.dot(p, w1t_ref[...], preferred_element_type=jnp.float32) + b1_ref[...]
        s = _if_spike(h)                                   # (B, hidden)
        o = jnp.dot(s, w2t_ref[...], preferred_element_type=jnp.float32) + b2_ref[...]
        return _if_spike(o)                                # (B, C)

    mw = branch(max_p, w1m_ref, b1m_ref, w2m_ref, b2m_ref)
    aw = branch(avg_p, w1a_ref, b1a_ref, w2a_ref, b2a_ref)
    weight = _if_spike(mw + aw)                            # (B, C) in {0, 1}

    # Lane-dense broadcast multiply + full-vreg store.
    o_ref[...] = weight[:, :, None] * x


def channel_attention(x, params, *, target_block_bytes=4 << 20):
    """x: [T, N, C, H, W] float32. Returns the same shape."""
    T, N, C, H, W = x.shape
    TN, HW = T * N, H * W
    hidden = params["w1_max"].shape[0]

    # Pad H*W up to a multiple of 128 so loads/stores are unmasked full vregs.
    HWp = -(-HW // 128) * 128
    xf = x.reshape(TN, C, HW)
    if HWp != HW:
        xf = jnp.pad(xf, ((0, 0), (0, 0), (0, HWp - HW)))

    # Batch T*N rows per grid step: ~target_block_bytes per input block, but keep
    # the grid length >= 2 (when possible) so megacore sharding still applies.
    bytes_per_row = C * HWp * 4
    b_tn = int(max(1, min(TN, target_block_bytes // max(bytes_per_row, 1))))
    if TN >= 2:
        b_tn = min(b_tn, -(-TN // 2))
    grid = (pl.cdiv(TN, b_tn),)

    # Weights pre-transposed to (in_features, out_features); biases as (1, out) rows.
    w1m_t = params["w1_max"].T
    w2m_t = params["w2_max"].T
    w1a_t = params["w1_avg"].T
    w2a_t = params["w2_avg"].T
    b1m = params["b1_max"].reshape(1, hidden)
    b2m = params["b2_max"].reshape(1, C)
    b1a = params["b1_avg"].reshape(1, hidden)
    b2a = params["b2_avg"].reshape(1, C)

    def resident(shape):
        # Constant block index across the grid -> DMA'd once, stays in VMEM.
        return pl.BlockSpec(shape, lambda i: (0, 0))

    kernel = functools.partial(_channel_attention_kernel,
                               hw_valid=HW, inv_hw=1.0 / HW)

    out = pl.pallas_call(
        kernel,
        out_shape=jax.ShapeDtypeStruct((TN, C, HWp), jnp.float32),
        grid_spec=pltpu.PrefetchScalarGridSpec(
            num_scalar_prefetch=0,
            grid=grid,
            in_specs=[
                pl.BlockSpec((b_tn, C, HWp), lambda i: (i, 0, 0)),
                resident((C, hidden)), resident((1, hidden)),
                resident((hidden, C)), resident((1, C)),
                resident((C, hidden)), resident((1, hidden)),
                resident((hidden, C)), resident((1, C)),
            ],
            out_specs=pl.BlockSpec((b_tn, C, HWp), lambda i: (i, 0, 0)),
        ),
        compiler_params=pltpu.CompilerParams(
            dimension_semantics=("parallel",),
            vmem_limit_bytes=48 << 20),
    )(xf,
      w1m_t, b1m, w2m_t, b2m,
      w1a_t, b1a, w2a_t, b2a)

    if HWp != HW:
        out = out[:, :, :HW]
    return out.reshape(T, N, C, H, W)


def channel_attention_ref(x, params):
    """Pure-JAX reference mirroring the PyTorch forward."""
    max_p = jnp.max(x, axis=(-2, -1))                  # (T, N, C)
    avg_p = jnp.mean(x, axis=(-2, -1))                 # (T, N, C)

    def branch(p, w1, b1, w2, b2):
        h = p @ w1.T + b1
        s = _if_spike(h)
        o = s @ w2.T + b2
        return _if_spike(o)

    mw = branch(max_p, params["w1_max"], params["b1_max"],
                params["w2_max"], params["b2_max"])
    aw = branch(avg_p, params["w1_avg"], params["b1_avg"],
                params["w2_avg"], params["b2_avg"])
    weight = _if_spike(mw + aw)                        # (T, N, C)
    return weight[..., None, None] * x


def init_params(key, in_channel, r=0.5):
    hidden = int(in_channel * r)
    keys = jax.random.split(key, 8)
    u = lambda k, shape: jax.random.uniform(k, shape, jnp.float32, -1.0, 1.0)
    return {
        # PyTorch nn.Linear convention: weight is (out_features, in_features).
        "w1_max": u(keys[0], (hidden, in_channel)),
        "b1_max": u(keys[1], (hidden,)),
        "w2_max": u(keys[2], (in_channel, hidden)),
        "b2_max": u(keys[3], (in_channel,)),
        "w1_avg": u(keys[4], (hidden, in_channel)),
        "b1_avg": u(keys[5], (hidden,)),
        "w2_avg": u(keys[6], (in_channel, hidden)),
        "b2_avg": u(keys[7], (in_channel,)),
    }


if __name__ == "__main__":
    T, N, C, H, W = 2, 2, 8, 16, 16
    key = jax.random.PRNGKey(0)
    k_x, k_p = jax.random.split(key)
    x = 2.0 * jax.random.normal(k_x, (T, N, C, H, W), jnp.float32)
    params = init_params(k_p, C, r=0.5)

    out = channel_attention(x, params)
    out = jax.block_until_ready(out)

    ref = channel_attention_ref(x, params)
    assert out.shape == (T, N, C, H, W)
    assert jnp.allclose(out, ref, atol=1e-5, rtol=1e-5), "mismatch vs pure-JAX reference"

    print("KERNEL_OK")
</pallas_src>

<mosaic_0001>
module attributes {stable_mosaic.version = 11 : i64} {
  func.func @_channel_attention_kernel(%arg0: i32, %arg1: memref<2x8x256xf32, #tpu.memory_space<vmem>>, %arg2: memref<8x4xf32, #tpu.memory_space<vmem>>, %arg3: memref<1x4xf32, #tpu.memory_space<vmem>>, %arg4: memref<4x8xf32, #tpu.memory_space<vmem>>, %arg5: memref<1x8xf32, #tpu.memory_space<vmem>>, %arg6: memref<8x4xf32, #tpu.memory_space<vmem>>, %arg7: memref<1x4xf32, #tpu.memory_space<vmem>>, %arg8: memref<4x8xf32, #tpu.memory_space<vmem>>, %arg9: memref<1x8xf32, #tpu.memory_space<vmem>>, %arg10: memref<2x8x256xf32, #tpu.memory_space<vmem>>) attributes {dimension_semantics = [#tpu.dimension_semantics<parallel>], iteration_bounds = array<i64: 2>, scalar_prefetch = 0 : i64, scratch_operands = 0 : i64, tpu.core_type = #tpu.core_type<tc>, window_params = [{transform_indices = @transform_0, window_bounds = array<i64: 2, 8, 256>}, {pipeline_mode = #tpu.pipeline_mode<synchronous>, transform_indices = @transform_1, window_bounds = array<i64: 8, 4>}, {pipeline_mode = #tpu.pipeline_mode<synchronous>, transform_indices = @transform_2, window_bounds = array<i64: 1, 4>}, {pipeline_mode = #tpu.pipeline_mode<synchronous>, transform_indices = @transform_3, window_bounds = array<i64: 4, 8>}, {pipeline_mode = #tpu.pipeline_mode<synchronous>, transform_indices = @transform_4, window_bounds = array<i64: 1, 8>}, {pipeline_mode = #tpu.pipeline_mode<synchronous>, transform_indices = @transform_5, window_bounds = array<i64: 8, 4>}, {pipeline_mode = #tpu.pipeline_mode<synchronous>, transform_indices = @transform_6, window_bounds = array<i64: 1, 4>}, {pipeline_mode = #tpu.pipeline_mode<synchronous>, transform_indices = @transform_7, window_bounds = array<i64: 4, 8>}, {pipeline_mode = #tpu.pipeline_mode<synchronous>, transform_indices = @transform_8, window_bounds = array<i64: 1, 8>}, {transform_indices = @transform_9, window_bounds = array<i64: 2, 8, 256>}]} {
    %c0 = arith.constant 0 : index
    %c0_0 = arith.constant 0 : index
    %c0_1 = arith.constant 0 : index
    %0 = vector.load %arg1[%c0, %c0_0, %c0_1] : memref<2x8x256xf32, #tpu.memory_space<vmem>>, vector<2x8x256xf32>
    %cst = arith.constant dense<0xFF800000> : vector<2x8xf32>
    %1 = vector.multi_reduction <maximumf>, %0, %cst [2] : vector<2x8x256xf32> to vector<2x8xf32>
    %cst_2 = arith.constant dense<0.000000e+00> : vector<2x8xf32>
    %2 = vector.multi_reduction <add>, %0, %cst_2 [2] : vector<2x8x256xf32> to vector<2x8xf32>
    %cst_3 = arith.constant 3.906250e-03 : f32
    %3 = vector.broadcast %cst_3 : f32 to vector<2x8xf32>
    %4 = arith.mulf %2, %3 : vector<2x8xf32>
    %c0_4 = arith.constant 0 : index
    %c0_5 = arith.constant 0 : index
    %5 = vector.load %arg2[%c0_4, %c0_5] : memref<8x4xf32, #tpu.memory_space<vmem>>, vector<8x4xf32>
    %cst_6 = arith.constant dense<0.000000e+00> : vector<2x4xf32>
    %6 = tpu.matmul %1, %5, %cst_6 {dimension_numbers = #tpu.dot_dimension_numbers<[1], [0], [0], [1], [0, 0, 1, 1], [], []>} : vector<2x8xf32>, vector<8x4xf32>, vector<2x4xf32> -> vector<2x4xf32>
    %c0_7 = arith.constant 0 : index
    %c0_8 = arith.constant 0 : index
    %7 = vector.load %arg3[%c0_7, %c0_8] : memref<1x4xf32, #tpu.memory_space<vmem>>, vector<1x4xf32>
    %8 = vector.broadcast %7 : vector<1x4xf32> to vector<2x4xf32>
    %9 = arith.addf %6, %8 : vector<2x4xf32>
    %cst_9 = arith.constant 1.000000e+00 : f32
    %10 = vector.broadcast %cst_9 : f32 to vector<2x4xf32>
    %11 = arith.cmpf oge, %9, %10 : vector<2x4xf32>
    %12 = arith.extui %11 : vector<2x4xi1> to vector<2x4xi32>
    %13 = arith.sitofp %12 : vector<2x4xi32> to vector<2x4xf32>
    %c0_10 = arith.constant 0 : index
    %c0_11 = arith.constant 0 : index
    %14 = vector.load %arg4[%c0_10, %c0_11] : memref<4x8xf32, #tpu.memory_space<vmem>>, vector<4x8xf32>
    %cst_12 = arith.constant dense<0.000000e+00> : vector<2x8xf32>
    %15 = tpu.matmul %13, %14, %cst_12 {dimension_numbers = #tpu.dot_dimension_numbers<[1], [0], [0], [1], [0, 0, 1, 1], [], []>} : vector<2x4xf32>, vector<4x8xf32>, vector<2x8xf32> -> vector<2x8xf32>
    %c0_13 = arith.constant 0 : index
    %c0_14 = arith.constant 0 : index
    %16 = vector.load %arg5[%c0_13, %c0_14] : memref<1x8xf32, #tpu.memory_space<vmem>>, vector<1x8xf32>
    %17 = vector.broadcast %16 : vector<1x8xf32> to vector<2x8xf32>
    %18 = arith.addf %15, %17 : vector<2x8xf32>
    %cst_15 = arith.constant 1.000000e+00 : f32
    %19 = vector.broadcast %cst_15 : f32 to vector<2x8xf32>
    %20 = arith.cmpf oge, %18, %19 : vector<2x8xf32>
    %21 = arith.extui %20 : vector<2x8xi1> to vector<2x8xi32>
    %22 = arith.sitofp %21 : vector<2x8xi32> to vector<2x8xf32>
    %c0_16 = arith.constant 0 : index
    %c0_17 = arith.constant 0 : index
    %23 = vector.load %arg6[%c0_16, %c0_17] : memref<8x4xf32, #tpu.memory_space<vmem>>, vector<8x4xf32>
    %cst_18 = arith.constant dense<0.000000e+00> : vector<2x4xf32>
    %24 = tpu.matmul %4, %23, %cst_18 {dimension_numbers = #tpu.dot_dimension_numbers<[1], [0], [0], [1], [0, 0, 1, 1], [], []>} : vector<2x8xf32>, vector<8x4xf32>, vector<2x4xf32> -> vector<2x4xf32>
    %c0_19 = arith.constant 0 : index
    %c0_20 = arith.constant 0 : index
    %25 = vector.load %arg7[%c0_19, %c0_20] : memref<1x4xf32, #tpu.memory_space<vmem>>, vector<1x4xf32>
    %26 = vector.broadcast %25 : vector<1x4xf32> to vector<2x4xf32>
    %27 = arith.addf %24, %26 : vector<2x4xf32>
    %cst_21 = arith.constant 1.000000e+00 : f32
    %28 = vector.broadcast %cst_21 : f32 to vector<2x4xf32>
    %29 = arith.cmpf oge, %27, %28 : vector<2x4xf32>
    %30 = arith.extui %29 : vector<2x4xi1> to vector<2x4xi32>
    %31 = arith.sitofp %30 : vector<2x4xi32> to vector<2x4xf32>
    %c0_22 = arith.constant 0 : index
    %c0_23 = arith.constant 0 : index
    %32 = vector.load %arg8[%c0_22, %c0_23] : memref<4x8xf32, #tpu.memory_space<vmem>>, vector<4x8xf32>
    %cst_24 = arith.constant dense<0.000000e+00> : vector<2x8xf32>
    %33 = tpu.matmul %31, %32, %cst_24 {dimension_numbers = #tpu.dot_dimension_numbers<[1], [0], [0], [1], [0, 0, 1, 1], [], []>} : vector<2x4xf32>, vector<4x8xf32>, vector<2x8xf32> -> vector<2x8xf32>
    %c0_25 = arith.constant 0 : index
    %c0_26 = arith.constant 0 : index
    %34 = vector.load %arg9[%c0_25, %c0_26] : memref<1x8xf32, #tpu.memory_space<vmem>>, vector<1x8xf32>
    %35 = vector.broadcast %34 : vector<1x8xf32> to vector<2x8xf32>
    %36 = arith.addf %33, %35 : vector<2x8xf32>
    %cst_27 = arith.constant 1.000000e+00 : f32
    %37 = vector.broadcast %cst_27 : f32 to vector<2x8xf32>
    %38 = arith.cmpf oge, %36, %37 : vector<2x8xf32>
    %39 = arith.extui %38 : vector<2x8xi1> to vector<2x8xi32>
    %40 = arith.sitofp %39 : vector<2x8xi32> to vector<2x8xf32>
    %41 = arith.addf %22, %40 : vector<2x8xf32>
    %cst_28 = arith.constant 1.000000e+00 : f32
    %42 = vector.broadcast %cst_28 : f32 to vector<2x8xf32>
    %43 = arith.cmpf oge, %41, %42 : vector<2x8xf32>
    %44 = arith.extui %43 : vector<2x8xi1> to vector<2x8xi32>
    %45 = arith.sitofp %44 : vector<2x8xi32> to vector<2x8xf32>
    %46 = vector.shape_cast %45 : vector<2x8xf32> to vector<2x8x1xf32>
    %47 = vector.broadcast %46 : vector<2x8x1xf32> to vector<2x8x256xf32>
    %48 = arith.mulf %47, %0 : vector<2x8x256xf32>
    %c0_29 = arith.constant 0 : index
    %c0_30 = arith.constant 0 : index
    %c0_31 = arith.constant 0 : index
    %49 = vector.load %arg10[%c0_29, %c0_30, %c0_31] : memref<2x8x256xf32, #tpu.memory_space<vmem>>, vector<2x8x256xf32>
    tpu.vector_store %arg10[%c0_29, %c0_30, %c0_31], %48 {strides = array<i32>} : memref<2x8x256xf32, #tpu.memory_space<vmem>>, vector<2x8x256xf32>,
    return
  }
  func.func @transform_0(%arg0: i32) -> (i32, i32, i32) {
    %c0_i32 = arith.constant 0 : i32
    %c0_i32_0 = arith.constant 0 : i32
    %c0_i32_1 = arith.constant 0 : i32
    return %arg0, %c0_i32, %c0_i32_0 : i32, i32, i32
  }
  func.func @transform_1(%arg0: i32) -> (i32, i32) {
    %c0_i32 = arith.constant 0 : i32
    %c0_i32_0 = arith.constant 0 : i32
    %c0_i32_1 = arith.constant 0 : i32
    return %c0_i32, %c0_i32_0 : i32, i32
  }
  func.func @transform_2(%arg0: i32) -> (i32, i32) {
    %c0_i32 = arith.constant 0 : i32
    %c0_i32_0 = arith.constant 0 : i32
    %c0_i32_1 = arith.constant 0 : i32
    return %c0_i32, %c0_i32_0 : i32, i32
  }
  func.func @transform_3(%arg0: i32) -> (i32, i32) {
    %c0_i32 = arith.constant 0 : i32
    %c0_i32_0 = arith.constant 0 : i32
    %c0_i32_1 = arith.constant 0 : i32
    return %c0_i32, %c0_i32_0 : i32, i32
  }
  func.func @transform_4(%arg0: i32) -> (i32, i32) {
    %c0_i32 = arith.constant 0 : i32
    %c0_i32_0 = arith.constant 0 : i32
    %c0_i32_1 = arith.constant 0 : i32
    return %c0_i32, %c0_i32_0 : i32, i32
  }
  func.func @transform_5(%arg0: i32) -> (i32, i32) {
    %c0_i32 = arith.constant 0 : i32
    %c0_i32_0 = arith.constant 0 : i32
    %c0_i32_1 = arith.constant 0 : i32
    return %c0_i32, %c0_i32_0 : i32, i32
  }
  func.func @transform_6(%arg0: i32) -> (i32, i32) {
    %c0_i32 = arith.constant 0 : i32
    %c0_i32_0 = arith.constant 0 : i32
    %c0_i32_1 = arith.constant 0 : i32
    return %c0_i32, %c0_i32_0 : i32, i32
  }
  func.func @transform_7(%arg0: i32) -> (i32, i32) {
    %c0_i32 = arith.constant 0 : i32
    %c0_i32_0 = arith.constant 0 : i32
    %c0_i32_1 = arith.constant 0 : i32
    return %c0_i32, %c0_i32_0 : i32, i32
  }
  func.func @transform_8(%arg0: i32) -> (i32, i32) {
    %c0_i32 = arith.constant 0 : i32
    %c0_i32_0 = arith.constant 0 : i32
    %c0_i32_1 = arith.constant 0 : i32
    return %c0_i32, %c0_i32_0 : i32, i32
  }
  func.func @transform_9(%arg0: i32) -> (i32, i32, i32) {
    %c0_i32 = arith.constant 0 : i32
    %c0_i32_0 = arith.constant 0 : i32
    %c0_i32_1 = arith.constant 0 : i32
    return %arg0, %c0_i32, %c0_i32_0 : i32, i32, i32
  }
}

</mosaic_0001>

<llo_original>
// kernel: tpu_custom_call.1
$region0: #{tpu_custom_call.1}
  #allocation0 [shape = 'u32[]', space=smem, size = 0x4, offset = 0x4, fixed_abs, tag = 'smem constant byte address 0x4 - core index']
  #allocation1 [shape = 'u32[144,128]{1,0:T(1,128)}', space=vmem, size = 0x12000, scoped, tag = 'internal scratch']
  %s0 = inlined_call_operand.hbm [shape: f32[4,8,256], index: 0, kind: input, shape index: {}]
  %s1 = inlined_call_operand.vmem [shape: f32[8,4], index: 1, kind: input, shape index: {}]
  %s2 = inlined_call_operand.vmem [shape: f32[1,4], index: 2, kind: input, shape index: {}]
  %s3 = inlined_call_operand.vmem [shape: f32[4,8], index: 3, kind: input, shape index: {}]
  %s4 = inlined_call_operand.vmem [shape: f32[1,8], index: 4, kind: input, shape index: {}]
  %s5 = inlined_call_operand.vmem [shape: f32[8,4], index: 5, kind: input, shape index: {}]
  %s6 = inlined_call_operand.vmem [shape: f32[1,4], index: 6, kind: input, shape index: {}]
  %s7 = inlined_call_operand.vmem [shape: f32[4,8], index: 7, kind: input, shape index: {}]
  %s8 = inlined_call_operand.vmem [shape: f32[1,8], index: 8, kind: input, shape index: {}]
  %s9 = inlined_call_operand.hbm [shape: f32[4,8,256], index: 9, kind: output, shape index: {}]
  %s10 = sld [smem:[#allocation0]]
  $region73: #{tpu_custom_call.1} parent=0
    _
  %s12 = ssub.s32 1, %s10
  %s13 = scalar_select 0, %s12, %s10
  $region1: #{tpu_custom_call.1} parent=0
    #allocation2 [shape = 'u8[32768]{0}', space=vmem, size = 0x8000, scoped, tag = 'input window, operand 0']
    #allocation3 [shape = 's32[2]{0}', space=sflag, size = 0x8, scoped, tag = 'scoped memory for tpu_custom_call.1']
    #allocation4 [shape = 's32[2]{0}', space=sflag, size = 0x8, scoped, tag = 'scoped memory for tpu_custom_call.1']
    #allocation5 [shape = 'u8[32768]{0}', space=vmem, size = 0x8000, scoped, tag = 'output window, operand 0']
    %14 = vsyncpa [#allocation3], 0
    %s15 = scalar_lea.sflag [#allocation3], 1
    %16 = vsyncpa %s15, 0
    %17 = vsyncpa [#allocation4], 0
    %s18 = scalar_lea.sflag [#allocation4], 1
    %19 = vsyncpa %s18, 0
    loop: start=0, step=1, limit=4
    $region2: #{tpu_custom_call.1} parent=1 // loop_pre_header
      _
    $region3: #{tpu_custom_call.1} parent=1 // loop_header
      %s21 = sphi 0, %s25
      %p22 = scmp.ge.s32.totalorder %s21, 4
      %s31 = sphi 0, %s33
      %s34 = sphi 0, %s31
      %s35 = sphi 0, %s34
      %s51 = sphi 0, %s35
      %s55 = sphi 0, %s55
      %s57 = sphi 0, %s55
      %s58 = sphi 0, %s57
      %s72 = sphi 0, %s58
      %s76 = sphi 0, %s76
      %s78 = sphi 0, %s76
      %s79 = sphi 0, %s78
      %s93 = sphi 0, %s79
      %s97 = sphi 0, %s97
      %s99 = sphi 0, %s97
      %s100 = sphi 0, %s99
      %s114 = sphi 0, %s100
      %s118 = sphi 0, %s118
      %s120 = sphi 0, %s118
      %s121 = sphi 0, %s120
      %s135 = sphi 0, %s121
      %s139 = sphi 0, %s139
      %s141 = sphi 0, %s139
      %s142 = sphi 0, %s141
      %s156 = sphi 0, %s142
      %s160 = sphi 0, %s160
      %s162 = sphi 0, %s160
      %s163 = sphi 0, %s162
      %s177 = sphi 0, %s163
      %s181 = sphi 0, %s181
      %s183 = sphi 0, %s181
      %s184 = sphi 0, %s183
      %s198 = sphi 0, %s184
      %s202 = sphi 0, %s202
      %s204 = sphi 0, %s202
      %s205 = sphi 0, %s204
      %s219 = sphi 0, %s205
      %s225 = sphi 0, %s227
      %s228 = sphi 0, %s225
      %s229 = sphi 0, %s228
      %s245 = sphi 0, %s229
    $region4: #{tpu_custom_call.1} parent=1 // loop_header_branch
      %24 = sbr.rel (%p22) target = $region8
    $region5: #{tpu_custom_call.1} parent=1 // loop_body
      %s26 = ssub.s32 %s21, 1
      %s27 = ssub.s32 %s21, 2
      %s28 = sadd.s32 %s21, 1
      %s29 = ssub.s32 %s21, %s28
      %p30 = scmp.eq.s32.totalorder %s29, 0
      %s32 = sadd.s32 %s31, 1
      %s33 = scalar_select %p30, %s31, %s32
      %p36 = pneg %p30
      %p37 = scmp.eq.s32.totalorder %s21, 1
      %p38 = por %p36, %p37
      %p39 = scmp.ne.s32.totalorder %s31, %s34
      %p40 = scmp.eq.s32.totalorder %s21, 0
      %p41 = por %p39, %p40
      %p42 = scmp.ne.s32.totalorder %s31, %s34
      %p43 = scmp.eq.s32.totalorder %s26, 1
      %p44 = por %p42, %p43
      %p45 = scmp.ne.s32.totalorder %s34, %s35
      %p46 = scmp.eq.s32.totalorder %s26, 0
      %p47 = por %p45, %p46
      %p48 = scmp.ne.s32.totalorder %s34, %s35
      %p49 = scmp.eq.s32.totalorder %s27, 1
      %p50 = por %p48, %p49
      %p52 = scmp.ne.s32.totalorder %s35, %s51
      %p53 = scmp.eq.s32.totalorder %s27, 0
      %p54 = por %p52, %p53
      %s56 = sadd.s32 %s55, 1
      %p59 = scmp.eq.s32.totalorder %s21, 1
      %p60 = scmp.ne.s32.totalorder %s55, %s57
      %p61 = scmp.eq.s32.totalorder %s21, 0
      %p62 = por %p60, %p61
      %p63 = scmp.ne.s32.totalorder %s55, %s57
      %p64 = scmp.eq.s32.totalorder %s26, 1
      %p65 = por %p63, %p64
      %p66 = scmp.ne.s32.totalorder %s57, %s58
      %p67 = scmp.eq.s32.totalorder %s26, 0
      %p68 = por %p66, %p67
      %p69 = scmp.ne.s32.totalorder %s57, %s58
      %p70 = scmp.eq.s32.totalorder %s27, 1
      %p71 = por %p69, %p70
      %p73 = scmp.ne.s32.totalorder %s58, %s72
      %p74 = scmp.eq.s32.totalorder %s27, 0
      %p75 = por %p73, %p74
      %s77 = sadd.s32 %s76, 1
      %p80 = scmp.eq.s32.totalorder %s21, 1
      %p81 = scmp.ne.s32.totalorder %s76, %s78
      %p82 = scmp.eq.s32.totalorder %s21, 0
      %p83 = por %p81, %p82
      %p84 = scmp.ne.s32.totalorder %s76, %s78
      %p85 = scmp.eq.s32.totalorder %s26, 1
      %p86 = por %p84, %p85
      %p87 = scmp.ne.s32.totalorder %s78, %s79
      %p88 = scmp.eq.s32.totalorder %s26, 0
      %p89 = por %p87, %p88
      %p90 = scmp.ne.s32.totalorder %s78, %s79
      %p91 = scmp.eq.s32.totalorder %s27, 1
      %p92 = por %p90, %p91
      %p94 = scmp.ne.s32.totalorder %s79, %s93
      %p95 = scmp.eq.s32.totalorder %s27, 0
      %p96 = por %p94, %p95
      %s98 = sadd.s32 %s97, 1
      %p101 = scmp.eq.s32.totalorder %s21, 1
      %p102 = scmp.ne.s32.totalorder %s97, %s99
      %p103 = scmp.eq.s32.totalorder %s21, 0
      %p104 = por %p102, %p103
      %p105 = scmp.ne.s32.totalorder %s97, %s99
      %p106 = scmp.eq.s32.totalorder %s26, 1
      %p107 = por %p105, %p106
      %p108 = scmp.ne.s32.totalorder %s99, %s100
      %p109 = scmp.eq.s32.totalorder %s26, 0
      %p110 = por %p108, %p109
      %p111 = scmp.ne.s32.totalorder %s99, %s100
      %p112 = scmp.eq.s32.totalorder %s27, 1
      %p113 = por %p111, %p112
      %p115 = scmp.ne.s32.totalorder %s100, %s114
      %p116 = scmp.eq.s32.totalorder %s27, 0
      %p117 = por %p115, %p116
      %s119 = sadd.s32 %s118, 1
      %p122 = scmp.eq.s32.totalorder %s21, 1
      %p123 = scmp.ne.s32.totalorder %s118, %s120
      %p124 = scmp.eq.s32.totalorder %s21, 0
      %p125 = por %p123, %p124
      %p126 = scmp.ne.s32.totalorder %s118, %s120
      %p127 = scmp.eq.s32.totalorder %s26, 1
      %p128 = por %p126, %p127
      %p129 = scmp.ne.s32.totalorder %s120, %s121
      %p130 = scmp.eq.s32.totalorder %s26, 0
      %p131 = por %p129, %p130
      %p132 = scmp.ne.s32.totalorder %s120, %s121
      %p133 = scmp.eq.s32.totalorder %s27, 1
      %p134 = por %p132, %p133
      %p136 = scmp.ne.s32.totalorder %s121, %s135
      %p137 = scmp.eq.s32.totalorder %s27, 0
      %p138 = por %p136, %p137
      %s140 = sadd.s32 %s139, 1
      %p143 = scmp.eq.s32.totalorder %s21, 1
      %p144 = scmp.ne.s32.totalorder %s139, %s141
      %p145 = scmp.eq.s32.totalorder %s21, 0
      %p146 = por %p144, %p145
      %p147 = scmp.ne.s32.totalorder %s139, %s141
      %p148 = scmp.eq.s32.totalorder %s26, 1
      %p149 = por %p147, %p148
      %p150 = scmp.ne.s32.totalorder %s141, %s142
      %p151 = scmp.eq.s32.totalorder %s26, 0
      %p152 = por %p150, %p151
      %p153 = scmp.ne.s32.totalorder %s141, %s142
      %p154 = scmp.eq.s32.totalorder %s27, 1
      %p155 = por %p153, %p154
      %p157 = scmp.ne.s32.totalorder %s142, %s156
      %p158 = scmp.eq.s32.totalorder %s27, 0
      %p159 = por %p157, %p158
      %s161 = sadd.s32 %s160, 1
      %p164 = scmp.eq.s32.totalorder %s21, 1
      %p165 = scmp.ne.s32.totalorder %s160, %s162
      %p166 = scmp.eq.s32.totalorder %s21, 0
      %p167 = por %p165, %p166
      %p168 = scmp.ne.s32.totalorder %s160, %s162
      %p169 = scmp.eq.s32.totalorder %s26, 1
      %p170 = por %p168, %p169
      %p171 = scmp.ne.s32.totalorder %s162, %s163
      %p172 = scmp.eq.s32.totalorder %s26, 0
      %p173 = por %p171, %p172
      %p174 = scmp.ne.s32.totalorder %s162, %s163
      %p175 = scmp.eq.s32.totalorder %s27, 1
      %p176 = por %p174, %p175
      %p178 = scmp.ne.s32.totalorder %s163, %s177
      %p179 = scmp.eq.s32.totalorder %s27, 0
      %p180 = por %p178, %p179
      %s182 = sadd.s32 %s181, 1
      %p185 = scmp.eq.s32.totalorder %s21, 1
      %p186 = scmp.ne.s32.totalorder %s181, %s183
      %p187 = scmp.eq.s32.totalorder %s21, 0
      %p188 = por %p186, %p187
      %p189 = scmp.ne.s32.totalorder %s181, %s183
      %p190 = scmp.eq.s32.totalorder %s26, 1
      %p191 = por %p189, %p190
      %p192 = scmp.ne.s32.totalorder %s183, %s184
      %p193 = scmp.eq.s32.totalorder %s26, 0
      %p194 = por %p192, %p193
      %p195 = scmp.ne.s32.totalorder %s183, %s184
      %p196 = scmp.eq.s32.totalorder %s27, 1
      %p197 = por %p195, %p196
      %p199 = scmp.ne.s32.totalorder %s184, %s198
      %p200 = scmp.eq.s32.totalorder %s27, 0
      %p201 = por %p199, %p200
      %s203 = sadd.s32 %s202, 1
      %p206 = scmp.eq.s32.totalorder %s21, 1
      %p207 = scmp.ne.s32.totalorder %s202, %s204
      %p208 = scmp.eq.s32.totalorder %s21, 0
      %p209 = por %p207, %p208
      %p210 = scmp.ne.s32.totalorder %s202, %s204
      %p211 = scmp.eq.s32.totalorder %s26, 1
      %p212 = por %p210, %p211
      %p213 = scmp.ne.s32.totalorder %s204, %s205
      %p214 = scmp.eq.s32.totalorder %s26, 0
      %p215 = por %p213, %p214
      %p216 = scmp.ne.s32.totalorder %s204, %s205
      %p217 = scmp.eq.s32.totalorder %s27, 1
      %p218 = por %p216, %p217
      %p220 = scmp.ne.s32.totalorder %s205, %s219
      %p221 = scmp.eq.s32.totalorder %s27, 0
      %p222 = por %p220, %p221
      %s223 = ssub.s32 %s21, %s28
      %p224 = scmp.eq.s32.totalorder %s223, 0
      %s226 = sadd.s32 %s225, 1
      %s227 = scalar_select %p224, %s225, %s226
      %p230 = pneg %p224
      %p231 = scmp.eq.s32.totalorder %s21, 1
      %p232 = por %p230, %p231
      %p233 = scmp.ne.s32.totalorder %s225, %s228
      %p234 = scmp.eq.s32.totalorder %s21, 0
      %p235 = por %p233, %p234
      %p236 = scmp.ne.s32.totalorder %s225, %s228
      %p237 = scmp.eq.s32.totalorder %s26, 1
      %p238 = por %p236, %p237
      %p239 = scmp.ne.s32.totalorder %s228, %s229
      %p240 = scmp.eq.s32.totalorder %s26, 0
      %p241 = por %p239, %p240
      %p242 = scmp.ne.s32.totalorder %s228, %s229
      %p243 = scmp.eq.s32.totalorder %s27, 1
      %p244 = por %p242, %p243
      %p246 = scmp.ne.s32.totalorder %s229, %s245
      %p247 = scmp.eq.s32.totalorder %s27, 0
      %p248 = por %p246, %p247
      %p249 = scmp.le.s32.totalorder 1, %s21
      %p250 = scmp.lt.s32.totalorder %s21, 3
      %p251 = pnand %p249, %p250
      %p252 = pneg %p251
      // Predicated region
      $region9: #{tpu_custom_call.1} parent=5 // pred_check
        _
      $region10: #{tpu_custom_call.1} parent=5 // pred_check_branch
        %254 = sbr.rel (%p251) target = $region12
      $region11: #{tpu_custom_call.1} parent=5 // pred_region
        %s255 = ssub.s32 %s21, 1
        // Predicated region
        $region13: #{tpu_custom_call.1} parent=11 // pred_check
          %p256 = pneg %p68
        $region14: #{tpu_custom_call.1} parent=11 // pred_check_branch
          %258 = sbr.rel (%p256) target = $region16
        $region15: #{tpu_custom_call.1} parent=11 // pred_region
          _
        $region16: #{tpu_custom_call.1} parent=11 // pred_fallthru
          _
        // Predicated region
        $region17: #{tpu_custom_call.1} parent=11 // pred_check
          %p259 = pneg %p89
        $region18: #{tpu_custom_call.1} parent=11 // pred_check_branch
          %261 = sbr.rel (%p259) target = $region20
        $region19: #{tpu_custom_call.1} parent=11 // pred_region
          _
        $region20: #{tpu_custom_call.1} parent=11 // pred_fallthru
          _
        // Predicated region
        $region21: #{tpu_custom_call.1} parent=11 // pred_check
          %p262 = pneg %p110
        $region22: #{tpu_custom_call.1} parent=11 // pred_check_branch
          %264 = sbr.rel (%p262) target = $region24
        $region23: #{tpu_custom_call.1} parent=11 // pred_region
          _
        $region24: #{tpu_custom_call.1} parent=11 // pred_fallthru
          _
        // Predicated region
        $region25: #{tpu_custom_call.1} parent=11 // pred_check
          %p265 = pneg %p131
        $region26: #{tpu_custom_call.1} parent=11 // pred_check_branch
          %267 = sbr.rel (%p265) target = $region28
        $region27: #{tpu_custom_call.1} parent=11 // pred_region
          _
        $region28: #{tpu_custom_call.1} parent=11 // pred_fallthru
          _
        // Predicated region
        $region29: #{tpu_custom_call.1} parent=11 // pred_check
          %p268 = pneg %p152
        $region30: #{tpu_custom_call.1} parent=11 // pred_check_branch
          %270 = sbr.rel (%p268) target = $region32
        $region31: #{tpu_custom_call.1} parent=11 // pred_region
          _
        $region32: #{tpu_custom_call.1} parent=11 // pred_fallthru
          _
        // Predicated region
        $region33: #{tpu_custom_call.1} parent=11 // pred_check
          %p271 = pneg %p173
        $region34: #{tpu_custom_call.1} parent=11 // pred_check_branch
          %273 = sbr.rel (%p271) target = $region36
        $region35: #{tpu_custom_call.1} parent=11 // pred_region
          _
        $region36: #{tpu_custom_call.1} parent=11 // pred_fallthru
          _
        // Predicated region
        $region37: #{tpu_custom_call.1} parent=11 // pred_check
          %p274 = pneg %p194
        $region38: #{tpu_custom_call.1} parent=11 // pred_check_branch
          %276 = sbr.rel (%p274) target = $region40
        $region39: #{tpu_custom_call.1} parent=11 // pred_region
          _
        $region40: #{tpu_custom_call.1} parent=11 // pred_fallthru
          _
        // Predicated region
        $region41: #{tpu_custom_call.1} parent=11 // pred_check
          %p277 = pneg %p215
        $region42: #{tpu_custom_call.1} parent=11 // pred_check_branch
          %279 = sbr.rel (%p277) target = $region44
        $region43: #{tpu_custom_call.1} parent=11 // pred_region
          _
        $region44: #{tpu_custom_call.1} parent=11 // pred_fallthru
          _
      $region12: #{tpu_custom_call.1} parent=5 // pred_fallthru
        _
      %p280 = scmp.lt.s32.totalorder %s21, 2
      // Predicated region
      $region45: #{tpu_custom_call.1} parent=5 // pred_check
        %p281 = pneg %p280
      $region46: #{tpu_custom_call.1} parent=5 // pred_check_branch
        %283 = sbr.rel (%p281) target = $region48
      $region47: #{tpu_custom_call.1} parent=5 // pred_region
        // Predicated region
        $region49: #{tpu_custom_call.1} parent=47 // pred_check
          %p284 = pneg %p41
        $region50: #{tpu_custom_call.1} parent=47 // pred_check_branch
          %286 = sbr.rel (%p284) target = $region52
        $region51: #{tpu_custom_call.1} parent=47 // pred_region
          %s287 = sand.u32 %s31, 1
          %s288 = scalar_lea.sflag [#allocation3], %s287
          %s289 = sand.u32 %s31, 1
          %s290 = smul.addr %s289, 32
          %s291 = scalar_lea.vmem [#allocation2], %s290
          %s292 = smul.u32 2, %s21
          %s294 = ssub.s32 512, 512
          %295 = vsyncadd %s288, %s294
          %s296 = smul.addr %s292, 2
          %s297 = smul.addr %s296, 128
          %s298 = scalar_lea.hbm %s0, %s297
          %s299 = sshll.u32 %s291, 4
          %s300 = int_to_ptr.vmem [resolvable:$true] %s299
          %305 = dma.hbm_to_vmem [thread:$0]  %s298, 512, %s300, %s288, 256, 256, 16
        $region52: #{tpu_custom_call.1} parent=47 // pred_fallthru
          _
      $region48: #{tpu_custom_call.1} parent=5 // pred_fallthru
        _
      %p306 = scmp.le.s32.totalorder 1, %s21
      %p307 = scmp.lt.s32.totalorder %s21, 3
      %p308 = pnand %p306, %p307
      %p309 = pneg %p308
      // Predicated region
      $region53: #{tpu_custom_call.1} parent=5 // pred_check
        _
      $region54: #{tpu_custom_call.1} parent=5 // pred_check_branch
        %311 = sbr.rel (%p308) target = $region56
      $region55: #{tpu_custom_call.1} parent=5 // pred_region
        %s312 = ssub.s32 %s21, 1
        %s313 = sand.u32 %s34, 1
        %s314 = scalar_lea.sflag [#allocation3], %s313
        %s315 = sand.u32 %s34, 1
        %s316 = smul.addr %s315, 32
        %s317 = scalar_lea.vmem [#allocation2], %s316
        // Predicated region
        $region57: #{tpu_custom_call.1} parent=55 // pred_check
          %p318 = pneg %p47
        $region58: #{tpu_custom_call.1} parent=55 // pred_check_branch
          %320 = sbr.rel (%p318) target = $region60
        $region59: #{tpu_custom_call.1} parent=55 // pred_region
          %321 = dma.done %s314, 512
        $region60: #{tpu_custom_call.1} parent=55 // pred_fallthru
          _
        %s322 = sand.u32 %s34, 1
        %s323 = scalar_lea.sflag [#allocation3], %s322
        %s324 = sand.u32 %s34, 1
        %s325 = smul.addr %s324, 32
        %s326 = scalar_lea.vmem [#allocation2], %s325
        %p327 = pneg %p47
        %p328 = pneg %p44
        %p329 = pneg %p68
        %p330 = pneg %p65
        %p331 = pneg %p89
        %p332 = pneg %p86
        %p333 = pneg %p110
        %p334 = pneg %p107
        %p335 = pneg %p131
        %p336 = pneg %p128
        %p337 = pneg %p152
        %p338 = pneg %p149
        %p339 = pneg %p173
        %p340 = pneg %p170
        %p341 = pneg %p194
        %p342 = pneg %p191
        %p343 = pneg %p215
        %p344 = pneg %p212
        %p345 = pneg %p241
        %p346 = pneg %p238
        %s347 = sand.u32 %s228, 1
        %s348 = scalar_lea.sflag [#allocation4], %s347
        %s349 = sand.u32 %s228, 1
        %s350 = smul.addr %s349, 32
        %s351 = scalar_lea.vmem [#allocation5], %s350
        %s352 = smul.u32 2, %s26
        %s353 = smul.u32 2, %s26
        %v354 = vld [vmem:[%s317] sm:$0xff]
        %v355 = vld [vmem:[%s317 + $0x8] sm:$0xff]
        %v356 = vld [vmem:[%s317 + $0x10] sm:$0xff]
        %v357 = vld [vmem:[%s317 + $0x18] sm:$0xff]
        %v358 = vmax.f32 %v354, %v355
        %359 = vmax.xlane.f32.xlu0 %v358
        %v360 = vpop.xlane.xlu0 %359
        %v361 = vmax.f32 %v356, %v357
        %362 = vmax.xlane.f32.xlu0 %v361
        %v363 = vpop.xlane.xlu0 %362
        %v364 = vadd.f32 %v354, %v355
        %365 = vadd.xlane.f32.xlu0 %v364
        %v366 = vpop.xlane.xlu0 %365
        %v367 = vadd.f32 %v356, %v357
        %368 = vadd.xlane.f32.xlu0 %v367
        %v369 = vpop.xlane.xlu0 %368
        %v370 = vmul.f32 %v366, 0.00390625
        %v371 = vmul.f32 %v369, 0.00390625
        %v372 = vld [vmem:[%s1] sm:$0xff]
        %v373 = vld [vmem:[%s2] sm:$0x1]
        %v375 = vlaneseq
        %v376 = vshrl.u32 %v375, 7
        %v377 = vsub.s32 0, %v376
        %v378 = vrot.slane %v373, %v377
        %v382 = vlaneseq
        %v383 = vand.u32 %v382, 127
        %v384 = vlaneseq
        %v385 = vshrl.u32 %v384, 7
        %v386 = vsub.s32 %v383, %v385
        %v387 = vrot.slane %v360, %v386
        %v388 = vlaneseq
        %v389 = vshrl.u32 %v388, 7
        %v390 = vsub.s32 %v383, %v389
        %v391 = vrot.slane %v363, %v390
        %vm392 = vcmask 1041409
        %v393 = vsel %vm392, %v391, %v387
        %vm394 = vcmask 64512
        %v395 = vsel %vm394, %v393, 0
        %397 = vmatprep.subr.mxu0 0.0
        %398 = vmatpush1.msra.mxu0 0.0
        %399 = vmatprep.subr.mxu0 0.0
        %400 = vmatpush1.msra.mxu0 0.0
        %401 = vmatprep.subr.mxu0 0.0
        %402 = vmatpush1.msra.mxu0 0.0
        %403 = vmatprep.subr.mxu0 0.0
        %404 = vmatpush1.msra.mxu0 0.0
        %405 = vmatprep.subr.mxu0 0.0
        %406 = vmatpush1.msra.mxu0 0.0
        %407 = vmatprep.subr.mxu0 0.0
        %408 = vmatpush1.msra.mxu0 0.0
        %409 = vmatprep.subr.mxu0 0.0
        %410 = vmatpush1.msra.mxu0 0.0
        %411 = vmatprep.subr.mxu0 0.0
        %412 = vmatpush1.msra.mxu0 0.0
        %413 = vmatprep.subr.mxu0 0.0
        %414 = vmatpush1.msra.mxu0 0.0
        %415 = vmatprep.subr.mxu0 0.0
        %416 = vmatpush1.msra.mxu0 0.0
        %417 = vmatprep.subr.mxu0 0.0
        %418 = vmatpush1.msra.mxu0 0.0
        %419 = vmatprep.subr.mxu0 0.0
        %420 = vmatpush1.msra.mxu0 0.0
        %421 = vmatprep.subr.mxu0 0.0
        %422 = vmatpush1.msra.mxu0 0.0
        %423 = vmatprep.subr.mxu0 0.0
        %424 = vmatpush1.msra.mxu0 0.0
        %425 = vmatprep.subr.mxu0 0.0
        %426 = vmatpush1.msra.mxu0 0.0
        %427 = vmatprep.subr.mxu0 0.0
        %428 = vmatpush1.msra.mxu0 %v372
        %429 = vmatprep.subr.mxu0 0.0
        %430 = vmatpush2.msra.mxu0 0.0
        %431 = vmatprep.subr.mxu0 0.0
        %432 = vmatpush2.msra.mxu0 0.0
        %433 = vmatprep.subr.mxu0 0.0
        %434 = vmatpush2.msra.mxu0 0.0
        %435 = vmatprep.subr.mxu0 0.0
        %436 = vmatpush2.msra.mxu0 0.0
        %437 = vmatprep.subr.mxu0 0.0
        %438 = vmatpush2.msra.mxu0 0.0
        %439 = vmatprep.subr.mxu0 0.0
        %440 = vmatpush2.msra.mxu0 0.0
        %441 = vmatprep.subr.mxu0 0.0
        %442 = vmatpush2.msra.mxu0 0.0
        %443 = vmatprep.subr.mxu0 0.0
        %444 = vmatpush2.msra.mxu0 0.0
        %445 = vmatprep.subr.mxu0 0.0
        %446 = vmatpush2.msra.mxu0 0.0
        %447 = vmatprep.subr.mxu0 0.0
        %448 = vmatpush2.msra.mxu0 0.0
        %449 = vmatprep.subr.mxu0 0.0
        %450 = vmatpush2.msra.mxu0 0.0
        %451 = vmatprep.subr.mxu0 0.0
        %452 = vmatpush2.msra.mxu0 0.0
        %453 = vmatprep.subr.mxu0 0.0
        %454 = vmatpush2.msra.mxu0 0.0
        %455 = vmatprep.subr.mxu0 0.0
        %456 = vmatpush2.msra.mxu0 0.0
        %457 = vmatprep.subr.mxu0 0.0
        %458 = vmatpush2.msra.mxu0 0.0
        %459 = vmatprep.subr.mxu0 0.0
        %460 = vmatpush2.msra.mxu0 0.0
        %461 = vmatprep.mubr.f32.mxu0 0.0
        %462 = vmatmul.mubr.f32.gmra.mxu0 %v395
        %v463 = vpop.f32.mrf.mxu0
        %v464 = vadd.f32 %v378, %v463
        %v465 = vpop.f32.mrf.mxu0
        %466 = vdwg.mxu0
        %vm467 = vcmp.ge.f32.partialorder %v464, 1.0
        %v468 = vsel %vm467, 1, 0
        %v469 = vcvt.s32.f32 %v468
        %v470 = vld [vmem:[%s3] sm:$0xf]
        %v471 = vld [vmem:[%s4] sm:$0x1]
        %v473 = vlaneseq
        %v474 = vshrl.u32 %v473, 7
        %v475 = vsub.s32 0, %v474
        %v476 = vrot.slane %v471, %v475
        %vm478 = vcmask 31744
        %v480 = vsel %vm478, %v469, 0
        %vm482 = vcmask 1043456
        %v484 = vsel %vm482, %v470, 0
        %486 = vmatprep.subr.mxu0 0.0
        %487 = vmatpush1.msra.mxu0 0.0
        %488 = vmatprep.subr.mxu0 0.0
        %489 = vmatpush1.msra.mxu0 0.0
        %490 = vmatprep.subr.mxu0 0.0
        %491 = vmatpush1.msra.mxu0 0.0
        %492 = vmatprep.subr.mxu0 0.0
        %493 = vmatpush1.msra.mxu0 0.0
        %494 = vmatprep.subr.mxu0 0.0
        %495 = vmatpush1.msra.mxu0 0.0
        %496 = vmatprep.subr.mxu0 0.0
        %497 = vmatpush1.msra.mxu0 0.0
        %498 = vmatprep.subr.mxu0 0.0
        %499 = vmatpush1.msra.mxu0 0.0
        %500 = vmatprep.subr.mxu0 0.0
        %501 = vmatpush1.msra.mxu0 0.0
        %502 = vmatprep.subr.mxu0 0.0
        %503 = vmatpush1.msra.mxu0 0.0
        %504 = vmatprep.subr.mxu0 0.0
        %505 = vmatpush1.msra.mxu0 0.0
        %506 = vmatprep.subr.mxu0 0.0
        %507 = vmatpush1.msra.mxu0 0.0
        %508 = vmatprep.subr.mxu0 0.0
        %509 = vmatpush1.msra.mxu0 0.0
        %510 = vmatprep.subr.mxu0 0.0
        %511 = vmatpush1.msra.mxu0 0.0
        %512 = vmatprep.subr.mxu0 0.0
        %513 = vmatpush1.msra.mxu0 0.0
        %514 = vmatprep.subr.mxu0 0.0
        %515 = vmatpush1.msra.mxu0 0.0
        %516 = vmatprep.subr.mxu0 0.0
        %517 = vmatpush1.msra.mxu0 %v484
        %518 = vmatprep.subr.mxu0 0.0
        %519 = vmatpush2.msra.mxu0 0.0
        %520 = vmatprep.subr.mxu0 0.0
        %521 = vmatpush2.msra.mxu0 0.0
        %522 = vmatprep.subr.mxu0 0.0
        %523 = vmatpush2.msra.mxu0 0.0
        %524 = vmatprep.subr.mxu0 0.0
        %525 = vmatpush2.msra.mxu0 0.0
        %526 = vmatprep.subr.mxu0 0.0
        %527 = vmatpush2.msra.mxu0 0.0
        %528 = vmatprep.subr.mxu0 0.0
        %529 = vmatpush2.msra.mxu0 0.0
        %530 = vmatprep.subr.mxu0 0.0
        %531 = vmatpush2.msra.mxu0 0.0
        %532 = vmatprep.subr.mxu0 0.0
        %533 = vmatpush2.msra.mxu0 0.0
        %534 = vmatprep.subr.mxu0 0.0
        %535 = vmatpush2.msra.mxu0 0.0
        %536 = vmatprep.subr.mxu0 0.0
        %537 = vmatpush2.msra.mxu0 0.0
        %538 = vmatprep.subr.mxu0 0.0
        %539 = vmatpush2.msra.mxu0 0.0
        %540 = vmatprep.subr.mxu0 0.0
        %541 = vmatpush2.msra.mxu0 0.0
        %542 = vmatprep.subr.mxu0 0.0
        %543 = vmatpush2.msra.mxu0 0.0
        %544 = vmatprep.subr.mxu0 0.0
        %545 = vmatpush2.msra.mxu0 0.0
        %546 = vmatprep.subr.mxu0 0.0
        %547 = vmatpush2.msra.mxu0 0.0
        %548 = vmatprep.subr.mxu0 0.0
        %549 = vmatpush2.msra.mxu0 0.0
        %550 = vmatprep.mubr.f32.mxu0 0.0
        %551 = vmatmul.mubr.f32.gmra.mxu0 %v480
        %v552 = vpop.f32.mrf.mxu0
        %v553 = vadd.f32 %v476, %v552
        %v554 = vpop.f32.mrf.mxu0
        %555 = vdwg.mxu0
        %vm556 = vcmp.ge.f32.partialorder %v553, 1.0
        %v557 = vsel %vm556, 1, 0
        %v558 = vcvt.s32.f32 %v557
        %v559 = vld [vmem:[%s5] sm:$0xff]
        %v560 = vld [vmem:[%s6] sm:$0x1]
        %v562 = vlaneseq
        %v563 = vshrl.u32 %v562, 7
        %v564 = vsub.s32 0, %v563
        %v565 = vrot.slane %v560, %v564
        %v569 = vlaneseq
        %v570 = vshrl.u32 %v569, 7
        %v571 = vsub.s32 %v383, %v570
        %v572 = vrot.slane %v370, %v571
        %v573 = vlaneseq
        %v574 = vshrl.u32 %v573, 7
        %v575 = vsub.s32 %v383, %v574
        %v576 = vrot.slane %v371, %v575
        %v577 = vsel %vm392, %v576, %v572
        %v578 = vsel %vm394, %v577, 0
        %580 = vmatprep.subr.mxu0 0.0
        %581 = vmatpush1.msra.mxu0 0.0
        %582 = vmatprep.subr.mxu0 0.0
        %583 = vmatpush1.msra.mxu0 0.0
        %584 = vmatprep.subr.mxu0 0.0
        %585 = vmatpush1.msra.mxu0 0.0
        %586 = vmatprep.subr.mxu0 0.0
        %587 = vmatpush1.msra.mxu0 0.0
        %588 = vmatprep.subr.mxu0 0.0
        %589 = vmatpush1.msra.mxu0 0.0
        %590 = vmatprep.subr.mxu0 0.0
        %591 = vmatpush1.msra.mxu0 0.0
        %592 = vmatprep.subr.mxu0 0.0
        %593 = vmatpush1.msra.mxu0 0.0
        %594 = vmatprep.subr.mxu0 0.0
        %595 = vmatpush1.msra.mxu0 0.0
        %596 = vmatprep.subr.mxu0 0.0
        %597 = vmatpush1.msra.mxu0 0.0
        %598 = vmatprep.subr.mxu0 0.0
        %599 = vmatpush1.msra.mxu0 0.0
        %600 = vmatprep.subr.mxu0 0.0
        %601 = vmatpush1.msra.mxu0 0.0
        %602 = vmatprep.subr.mxu0 0.0
        %603 = vmatpush1.msra.mxu0 0.0
        %604 = vmatprep.subr.mxu0 0.0
        %605 = vmatpush1.msra.mxu0 0.0
        %606 = vmatprep.subr.mxu0 0.0
        %607 = vmatpush1.msra.mxu0 0.0
        %608 = vmatprep.subr.mxu0 0.0
        %609 = vmatpush1.msra.mxu0 0.0
        %610 = vmatprep.subr.mxu0 0.0
        %611 = vmatpush1.msra.mxu0 %v559
        %612 = vmatprep.subr.mxu0 0.0
        %613 = vmatpush2.msra.mxu0 0.0
        %614 = vmatprep.subr.mxu0 0.0
        %615 = vmatpush2.msra.mxu0 0.0
        %616 = vmatprep.subr.mxu0 0.0
        %617 = vmatpush2.msra.mxu0 0.0
        %618 = vmatprep.subr.mxu0 0.0
        %619 = vmatpush2.msra.mxu0 0.0
        %620 = vmatprep.subr.mxu0 0.0
        %621 = vmatpush2.msra.mxu0 0.0
        %622 = vmatprep.subr.mxu0 0.0
        %623 = vmatpush2.msra.mxu0 0.0
        %624 = vmatprep.subr.mxu0 0.0
        %625 = vmatpush2.msra.mxu0 0.0
        %626 = vmatprep.subr.mxu0 0.0
        %627 = vmatpush2.msra.mxu0 0.0
        %628 = vmatprep.subr.mxu0 0.0
        %629 = vmatpush2.msra.mxu0 0.0
        %630 = vmatprep.subr.mxu0 0.0
        %631 = vmatpush2.msra.mxu0 0.0
        %632 = vmatprep.subr.mxu0 0.0
        %633 = vmatpush2.msra.mxu0 0.0
        %634 = vmatprep.subr.mxu0 0.0
        %635 = vmatpush2.msra.mxu0 0.0
        %636 = vmatprep.subr.mxu0 0.0
        %637 = vmatpush2.msra.mxu0 0.0
        %638 = vmatprep.subr.mxu0 0.0
        %639 = vmatpush2.msra.mxu0 0.0
        %640 = vmatprep.subr.mxu0 0.0
        %641 = vmatpush2.msra.mxu0 0.0
        %642 = vmatprep.subr.mxu0 0.0
        %643 = vmatpush2.msra.mxu0 0.0
        %644 = vmatprep.mubr.f32.mxu0 0.0
        %645 = vmatmul.mubr.f32.gmra.mxu0 %v578
        %v646 = vpop.f32.mrf.mxu0
        %v647 = vadd.f32 %v565, %v646
        %v648 = vpop.f32.mrf.mxu0
        %649 = vdwg.mxu0
        %vm650 = vcmp.ge.f32.partialorder %v647, 1.0
        %v651 = vsel %vm650, 1, 0
        %v652 = vcvt.s32.f32 %v651
        %v653 = vld [vmem:[%s7] sm:$0xf]
        %v654 = vld [vmem:[%s8] sm:$0x1]
        %v656 = vlaneseq
        %v657 = vshrl.u32 %v656, 7
        %v658 = vsub.s32 0, %v657
        %v659 = vrot.slane %v654, %v658
        %v662 = vsel %vm478, %v652, 0
        %v665 = vsel %vm482, %v653, 0
        %667 = vmatprep.subr.mxu0 0.0
        %668 = vmatpush1.msra.mxu0 0.0
        %669 = vmatprep.subr.mxu0 0.0
        %670 = vmatpush1.msra.mxu0 0.0
        %671 = vmatprep.subr.mxu0 0.0
        %672 = vmatpush1.msra.mxu0 0.0
        %673 = vmatprep.subr.mxu0 0.0
        %674 = vmatpush1.msra.mxu0 0.0
        %675 = vmatprep.subr.mxu0 0.0
        %676 = vmatpush1.msra.mxu0 0.0
        %677 = vmatprep.subr.mxu0 0.0
        %678 = vmatpush1.msra.mxu0 0.0
        %679 = vmatprep.subr.mxu0 0.0
        %680 = vmatpush1.msra.mxu0 0.0
        %681 = vmatprep.subr.mxu0 0.0
        %682 = vmatpush1.msra.mxu0 0.0
        %683 = vmatprep.subr.mxu0 0.0
        %684 = vmatpush1.msra.mxu0 0.0
        %685 = vmatprep.subr.mxu0 0.0
        %686 = vmatpush1.msra.mxu0 0.0
        %687 = vmatprep.subr.mxu0 0.0
        %688 = vmatpush1.msra.mxu0 0.0
        %689 = vmatprep.subr.mxu0 0.0
        %690 = vmatpush1.msra.mxu0 0.0
        %691 = vmatprep.subr.mxu0 0.0
        %692 = vmatpush1.msra.mxu0 0.0
        %693 = vmatprep.subr.mxu0 0.0
        %694 = vmatpush1.msra.mxu0 0.0
        %695 = vmatprep.subr.mxu0 0.0
        %696 = vmatpush1.msra.mxu0 0.0
        %697 = vmatprep.subr.mxu0 0.0
        %698 = vmatpush1.msra.mxu0 %v665
        %699 = vmatprep.subr.mxu0 0.0
        %700 = vmatpush2.msra.mxu0 0.0
        %701 = vmatprep.subr.mxu0 0.0
        %702 = vmatpush2.msra.mxu0 0.0
        %703 = vmatprep.subr.mxu0 0.0
        %704 = vmatpush2.msra.mxu0 0.0
        %705 = vmatprep.subr.mxu0 0.0
        %706 = vmatpush2.msra.mxu0 0.0
        %707 = vmatprep.subr.mxu0 0.0
        %708 = vmatpush2.msra.mxu0 0.0
        %709 = vmatprep.subr.mxu0 0.0
        %710 = vmatpush2.msra.mxu0 0.0
        %711 = vmatprep.subr.mxu0 0.0
        %712 = vmatpush2.msra.mxu0 0.0
        %713 = vmatprep.subr.mxu0 0.0
        %714 = vmatpush2.msra.mxu0 0.0
        %715 = vmatprep.subr.mxu0 0.0
        %716 = vmatpush2.msra.mxu0 0.0
        %717 = vmatprep.subr.mxu0 0.0
        %718 = vmatpush2.msra.mxu0 0.0
        %719 = vmatprep.subr.mxu0 0.0
        %720 = vmatpush2.msra.mxu0 0.0
        %721 = vmatprep.subr.mxu0 0.0
        %722 = vmatpush2.msra.mxu0 0.0
        %723 = vmatprep.subr.mxu0 0.0
        %724 = vmatpush2.msra.mxu0 0.0
        %725 = vmatprep.subr.mxu0 0.0
        %726 = vmatpush2.msra.mxu0 0.0
        %727 = vmatprep.subr.mxu0 0.0
        %728 = vmatpush2.msra.mxu0 0.0
        %729 = vmatprep.subr.mxu0 0.0
        %730 = vmatpush2.msra.mxu0 0.0
        %731 = vmatprep.mubr.f32.mxu0 0.0
        %732 = vmatmul.mubr.f32.gmra.mxu0 %v662
        %v733 = vpop.f32.mrf.mxu0
        %v734 = vadd.f32 %v659, %v733
        %v735 = vpop.f32.mrf.mxu0
        %736 = vdwg.mxu0
        %vm737 = vcmp.ge.f32.partialorder %v734, 1.0
        %v738 = vsel %vm737, 1, 0
        %v739 = vcvt.s32.f32 %v738
        %v740 = vadd.f32 %v558, %v739
        %vm741 = vcmp.ge.f32.partialorder %v740, 1.0
        %v742 = vsel %vm741, 1, 0
        %v743 = vcvt.s32.f32 %v742
        %v744 = vlaneseq
        %v745 = vshrl.u32 %v744, 7
        %v746 = vsub.s32 0, %v745
        %v747 = vrot.slane %v743, %v746
        %749 = vbcast.lane.b32.xlu0 %v747, 256
        %v750 = vpop.permute.xlu0 %749
        %v751 = vlaneseq
        %v752 = vshrl.u32 %v751, 7
        %v753 = vsub.s32 1, %v752
        %v754 = vrot.slane %v743, %v753
        %756 = vbcast.lane.b32.xlu0 %v754, 256
        %v757 = vpop.permute.xlu0 %756
        %v758 = vmul.f32 %v750, %v354
        %v759 = vmul.f32 %v750, %v355
        %v760 = vmul.f32 %v757, %v356
        %v761 = vmul.f32 %v757, %v357
        %762 = vst [vmem:[%s351] sm:$0xff] %v758
        %763 = vst [vmem:[%s351 + $0x8] sm:$0xff] %v759
        %764 = vst [vmem:[%s351 + $0x10] sm:$0xff] %v760
        %765 = vst [vmem:[%s351 + $0x18] sm:$0xff] %v761
        %s766 = sand.u32 %s228, 1
        %s767 = scalar_lea.sflag [#allocation4], %s766
        %s768 = sand.u32 %s228, 1
        %s769 = smul.addr %s768, 32
        %s770 = scalar_lea.vmem [#allocation5], %s769
        // Predicated region
        $region61: #{tpu_custom_call.1} parent=55 // pred_check
          %p771 = pneg %p238
        $region62: #{tpu_custom_call.1} parent=55 // pred_check_branch
          %773 = sbr.rel (%p771) target = $region64
        $region63: #{tpu_custom_call.1} parent=55 // pred_region
          %s774 = smul.u32 2, %s26
          %s776 = ssub.s32 512, 512
          %777 = vsyncadd %s767, %s776
          %s778 = smul.addr %s774, 2
          %s779 = smul.addr %s778, 128
          %s780 = scalar_lea.hbm %s9, %s779
          %s781 = sshll.u32 %s770, 4
          %s782 = int_to_ptr.vmem [resolvable:$true] %s781
          %787 = dma.vmem_to_hbm [thread:$0]  %s782, 512, %s780, %s767, 256, 256, 16
        $region64: #{tpu_custom_call.1} parent=55 // pred_fallthru
          _
      $region56: #{tpu_custom_call.1} parent=5 // pred_fallthru
        _
      %p788 = scmp.le.s32.totalorder 2, %s21
      // Predicated region
      $region65: #{tpu_custom_call.1} parent=5 // pred_check
        %p789 = pneg %p788
      $region66: #{tpu_custom_call.1} parent=5 // pred_check_branch
        %791 = sbr.rel (%p789) target = $region68
      $region67: #{tpu_custom_call.1} parent=5 // pred_region
        %s792 = ssub.s32 %s21, 2
        // Predicated region
        $region69: #{tpu_custom_call.1} parent=67 // pred_check
          %p793 = pneg %p244
        $region70: #{tpu_custom_call.1} parent=67 // pred_check_branch
          %795 = sbr.rel (%p793) target = $region72
        $region71: #{tpu_custom_call.1} parent=67 // pred_region
          %s796 = sand.u32 %s229, 1
          %s797 = scalar_lea.sflag [#allocation4], %s796
          %s798 = sand.u32 %s229, 1
          %s799 = smul.addr %s798, 32
          %s800 = scalar_lea.vmem [#allocation5], %s799
          %801 = dma.done %s797, 512
        $region72: #{tpu_custom_call.1} parent=67 // pred_fallthru
          _
      $region68: #{tpu_custom_call.1} parent=5 // pred_fallthru
        _
    $region6: #{tpu_custom_call.1} parent=1 // loop_footer
      %s25 = sadd.s32 1, %s21
    $region7: #{tpu_custom_call.1} parent=1 // loop_footer_branch
      %20 = sbr.rel target = $region3
    $region8: #{tpu_custom_call.1} parent=1 // loop_exit
      _
    %802 = vsyncpa [#allocation3], 1
    %s803 = scalar_lea.sflag [#allocation3], 1
    %804 = vsyncpa %s803, 1
    %805 = vsyncpa [#allocation4], 1
    %s806 = scalar_lea.sflag [#allocation4], 1
    %807 = vsyncpa %s806, 1

</llo_original>
